<compile_context>
chip_gen: v5e
topology: v5e:2x2
jax: 0.10.0
libtpu: 0.0.40
codegen_flags: <defaults>
</compile_context>

<pallas_src>
import functools

import jax
import jax.numpy as jnp
from jax import lax
from jax.experimental import pallas as pl
from jax.experimental.pallas import tpu as pltpu

EPS = 1e-5


def _round_up(x, m):
    return (x + m - 1) // m * m


# ---------------------------------------------------------------------------
# Kernel
# ---------------------------------------------------------------------------
def _dynamic_pos_bias_kernel(x_ref, wp_ref, vp_ref, out_ref, *,
                             pos_dim, num_heads, pd8, nh8):
    """Process one lane tile of T positions.

    x_ref   : (2, T)               biases, transposed (N on the lane axis)
    wp_ref  : (3*pd8 + nh8, C)     packed weights; each block starts 8-row aligned
    vp_ref  : (P8, 10)             packed bias / gamma / beta column vectors
    out_ref : (nh8, T)             heads-major output (padded sublane rows = 0)
    """
    x = x_ref[...]
    wp = wp_ref[...]
    vp = vp_ref[...]

    # ---- unpack parameters (8-row-aligned static slices -> no relayout) ----
    w0 = wp[0:pos_dim, 0:2]                           # (pos_dim, 2)
    w1 = wp[pd8:pd8 + pos_dim, 0:pos_dim]             # (pos_dim, pos_dim)
    w2 = wp[2 * pd8:2 * pd8 + pos_dim, 0:pos_dim]     # (pos_dim, pos_dim)
    w3 = wp[3 * pd8:3 * pd8 + nh8, 0:pos_dim]         # (nh8, pos_dim), pad rows 0

    def col(j, n):                                    # sliced exactly once each
        return vp[0:n, j:j + 1]                       # (n, 1)

    b0 = col(0, pos_dim)
    g1, be1, b1 = col(1, pos_dim), col(2, pos_dim), col(3, pos_dim)
    g2, be2, b2 = col(4, pos_dim), col(5, pos_dim), col(6, pos_dim)
    g3, be3 = col(7, pos_dim), col(8, pos_dim)
    b3 = col(9, nh8)                                  # padded bias rows = 0

    def ln_relu_linear(h, gamma, beta, wt, b):
        # LayerNorm over the feature (sublane) axis.
        mu = jnp.mean(h, axis=0, keepdims=True)
        var = jnp.mean((h - mu) ** 2, axis=0, keepdims=True)
        hn = (h - mu) * lax.rsqrt(var + EPS)
        hn = hn * gamma + beta
        hn = jnp.maximum(hn, 0.0)
        # Tiny-K matmul on the otherwise-idle MXU (unloads the XLU/VALU slots).
        return jnp.dot(wt, hn, preferred_element_type=jnp.float32) + b

    # pos_proj: Linear(2 -> pos_dim). K=2 is too small for the MXU; 2 VPU MACs.
    h = w0[:, 0:1] * x[0:1, :] + w0[:, 1:2] * x[1:2, :] + b0    # (pos_dim, T)

    h = ln_relu_linear(h, g1, be1, w1, b1)                      # (pos_dim, T)
    h = ln_relu_linear(h, g2, be2, w2, b2)                      # (pos_dim, T)
    h = ln_relu_linear(h, g3, be3, w3, b3)                      # (nh8, T)

    out_ref[...] = h.astype(out_ref.dtype)


# ---------------------------------------------------------------------------
# One-time parameter packing (hoisted out of the per-call path)
# ---------------------------------------------------------------------------
def pack_params(params):
    """Pack the 14 DynamicPosBias parameters into two kernel-friendly arrays."""
    pos_dim = params["w1"].shape[0]
    num_heads = params["w3"].shape[1]
    pd8 = _round_up(pos_dim, 8)
    nh8 = _round_up(num_heads, 8)
    cols = max(pos_dim, 2)

    wp = jnp.zeros((3 * pd8 + nh8, cols), jnp.float32)
    wp = wp.at[0:pos_dim, 0:2].set(params["w0"].T.astype(jnp.float32))
    wp = wp.at[pd8:pd8 + pos_dim, 0:pos_dim].set(params["w1"].T.astype(jnp.float32))
    wp = wp.at[2 * pd8:2 * pd8 + pos_dim, 0:pos_dim].set(params["w2"].T.astype(jnp.float32))
    wp = wp.at[3 * pd8:3 * pd8 + num_heads, 0:pos_dim].set(params["w3"].T.astype(jnp.float32))

    names = ["b0", "g1", "be1", "b1", "g2", "be2", "b2", "g3", "be3", "b3"]
    p8 = max(pd8, nh8)
    vp = jnp.zeros((p8, len(names)), jnp.float32)
    for j, name in enumerate(names):
        v = params[name].reshape(-1).astype(jnp.float32)
        vp = vp.at[:v.shape[0], j].set(v)

    cfg = dict(pos_dim=pos_dim, num_heads=num_heads, pd8=pd8, nh8=nh8)
    return wp, vp, cfg


# ---------------------------------------------------------------------------
# pallas_call wrapper
# ---------------------------------------------------------------------------
def _dynamic_pos_bias_call(biases, wp, vp, cfg, *, tile_n=1024, heads_major=False):
    N = biases.shape[0]
    pos_dim, num_heads = cfg["pos_dim"], cfg["num_heads"]
    pd8, nh8 = cfg["pd8"], cfg["nh8"]

    # One grid step whenever N fits one tile; multi-step only for very large N.
    # (Keep tile_n <= ~2048 to stay comfortably inside the 64-vreg file.)
    tile = min(_round_up(max(tile_n, 128), 128), _round_up(max(N, 1), 128))
    n_pad = _round_up(max(N, 1), tile)
    grid = (n_pad // tile,)

    # Lane-dense transposed input (2, N_pad), zero padded.
    x_t = jnp.zeros((2, n_pad), jnp.float32).at[:, :N].set(
        biases.astype(jnp.float32).T)

    kernel = functools.partial(
        _dynamic_pos_bias_kernel,
        pos_dim=pos_dim, num_heads=num_heads, pd8=pd8, nh8=nh8)

    flops = (2 * N * pos_dim * (2 + 2 * pos_dim + num_heads)   # linears
             + 12 * N * pos_dim)                               # LN / ReLU
    cost = pl.CostEstimate(
        flops=int(flops),
        transcendentals=int(3 * N),
        bytes_accessed=int(4 * (2 * n_pad + nh8 * n_pad + wp.size + vp.size)),
    )

    out_t = pl.pallas_call(
        kernel,
        out_shape=jax.ShapeDtypeStruct((nh8, n_pad), jnp.float32),
        grid_spec=pl.GridSpec(
            grid=grid,
            in_specs=[
                pl.BlockSpec((2, tile), lambda i: (0, i)),     # biases (transposed)
                pl.BlockSpec(wp.shape, lambda i: (0, 0)),      # packed weights
                pl.BlockSpec(vp.shape, lambda i: (0, 0)),      # packed vectors
            ],
            out_specs=pl.BlockSpec((nh8, tile), lambda i: (0, i)),
        ),
        compiler_params=pltpu.CompilerParams(
            dimension_semantics=("parallel",)),
        cost_estimate=cost,
    )(x_t, wp, vp)

    if heads_major:
        return out_t[:num_heads, :N]          # (num_heads, N): no extra transpose
    return out_t[:num_heads, :N].T            # (N, num_heads): PyTorch layout


def make_dynamic_pos_bias(params, *, tile_n=1024, heads_major=False):
    """Pack parameters once and return a jitted forward: biases -> pos."""
    wp, vp, cfg = pack_params(params)
    fwd = functools.partial(_dynamic_pos_bias_call, wp=wp, vp=vp, cfg=cfg,
                            tile_n=tile_n, heads_major=heads_major)
    return jax.jit(fwd)


def dynamic_pos_bias(biases, params, **kw):
    """One-off convenience wrapper (packs parameters on every call)."""
    wp, vp, cfg = pack_params(params)
    return _dynamic_pos_bias_call(biases, wp, vp, cfg, **kw)


# ---------------------------------------------------------------------------
# Reference + parameter init
# ---------------------------------------------------------------------------
def init_params(key, dim, num_heads):
    """Deterministic synthetic parameters matching DynamicPosBias.__init__."""
    pos_dim = dim // 4
    ks = jax.random.split(key, 4)

    def lin(k, fan_in, fan_out):
        bound = 1.0 / jnp.sqrt(fan_in)
        kw, kb = jax.random.split(k)
        w = jax.random.uniform(kw, (fan_in, fan_out), jnp.float32, -bound, bound)
        b = jax.random.uniform(kb, (1, fan_out), jnp.float32, -bound, bound)
        return w, b

    w0, b0 = lin(ks[0], 2, pos_dim)
    w1, b1 = lin(ks[1], pos_dim, pos_dim)
    w2, b2 = lin(ks[2], pos_dim, pos_dim)
    w3, b3 = lin(ks[3], pos_dim, num_heads)

    ones = lambda n: jnp.ones((1, n), jnp.float32)
    zeros = lambda n: jnp.zeros((1, n), jnp.float32)

    return {
        "w0": w0, "b0": b0,
        "g1": ones(pos_dim), "be1": zeros(pos_dim), "w1": w1, "b1": b1,
        "g2": ones(pos_dim), "be2": zeros(pos_dim), "w2": w2, "b2": b2,
        "g3": ones(pos_dim), "be3": zeros(pos_dim), "w3": w3, "b3": b3,
    }


def dynamic_pos_bias_ref(biases, p):
    """Pure-JAX reference (mirrors the PyTorch forward, row-major layout)."""
    def ln(h, g, b):
        mu = jnp.mean(h, -1, keepdims=True)
        var = jnp.mean((h - mu) ** 2, -1, keepdims=True)
        return (h - mu) / jnp.sqrt(var + EPS) * g + b

    h = biases @ p["w0"] + p["b0"]
    h = jnp.maximum(ln(h, p["g1"], p["be1"]), 0.0) @ p["w1"] + p["b1"]
    h = jnp.maximum(ln(h, p["g2"], p["be2"]), 0.0) @ p["w2"] + p["b2"]
    h = jnp.maximum(ln(h, p["g3"], p["be3"]), 0.0) @ p["w3"] + p["b3"]
    return h


if __name__ == "__main__":
    key = jax.random.PRNGKey(0)
    k_in, k_par = jax.random.split(key)

    dim = 32           # -> pos_dim = 8
    num_heads = 4
    Wh = Ww = 8
    N = (2 * Wh - 1) * (2 * Ww - 1)   # 225: realistic odd DynamicPosBias size

    biases = jax.random.normal(k_in, (N, 2), jnp.float32)
    params = init_params(k_par, dim, num_heads)

    # Pack once, reuse the jitted forward (packing hoisted out of the call path).
    fwd = make_dynamic_pos_bias(params)
    out = jax.block_until_ready(fwd(biases))

    ref = dynamic_pos_bias_ref(biases, params)
    assert out.shape == (N, num_heads)
    assert jnp.allclose(out, ref, atol=1e-4, rtol=1e-4), "mismatch vs reference"

    # Heads-major path (no trailing transpose) must agree as well.
    out_hm = jax.block_until_ready(
        make_dynamic_pos_bias(params, heads_major=True)(biases))
    assert out_hm.shape == (num_heads, N)
    assert jnp.allclose(out_hm.T, ref, atol=1e-4, rtol=1e-4), "heads-major mismatch"

    print("KERNEL_OK")
</pallas_src>

<mosaic_0001>
module attributes {stable_mosaic.version = 11 : i64} {
  func.func @_dynamic_pos_bias_kernel(%arg0: i32, %arg1: memref<2x256xf32, #tpu.memory_space<vmem>>, %arg2: memref<32x8xf32, #tpu.memory_space<vmem>>, %arg3: memref<8x10xf32, #tpu.memory_space<vmem>>, %arg4: memref<8x256xf32, #tpu.memory_space<vmem>>) attributes {dimension_semantics = [#tpu.dimension_semantics<parallel>], iteration_bounds = array<i64: 1>, scalar_prefetch = 0 : i64, scratch_operands = 0 : i64, tpu.core_type = #tpu.core_type<tc>, window_params = [{transform_indices = @transform_0, window_bounds = array<i64: 2, 256>}, {pipeline_mode = #tpu.pipeline_mode<synchronous>, transform_indices = @transform_1, window_bounds = array<i64: 32, 8>}, {pipeline_mode = #tpu.pipeline_mode<synchronous>, transform_indices = @transform_2, window_bounds = array<i64: 8, 10>}, {transform_indices = @transform_3, window_bounds = array<i64: 8, 256>}]} {
    %c0 = arith.constant 0 : index
    %c0_0 = arith.constant 0 : index
    %0 = vector.load %arg1[%c0, %c0_0] : memref<2x256xf32, #tpu.memory_space<vmem>>, vector<2x256xf32>
    %c0_1 = arith.constant 0 : index
    %c0_2 = arith.constant 0 : index
    %1 = vector.load %arg2[%c0_1, %c0_2] : memref<32x8xf32, #tpu.memory_space<vmem>>, vector<32x8xf32>
    %c0_3 = arith.constant 0 : index
    %c0_4 = arith.constant 0 : index
    %2 = vector.load %arg3[%c0_3, %c0_4] : memref<8x10xf32, #tpu.memory_space<vmem>>, vector<8x10xf32>
    %3 = vector.extract_strided_slice %1 {offsets = [0, 0], sizes = [8, 2], strides = [1, 1]} : vector<32x8xf32> to vector<8x2xf32>
    %4 = vector.extract_strided_slice %1 {offsets = [8, 0], sizes = [8, 8], strides = [1, 1]} : vector<32x8xf32> to vector<8x8xf32>
    %5 = vector.extract_strided_slice %1 {offsets = [16, 0], sizes = [8, 8], strides = [1, 1]} : vector<32x8xf32> to vector<8x8xf32>
    %6 = vector.extract_strided_slice %1 {offsets = [24, 0], sizes = [8, 8], strides = [1, 1]} : vector<32x8xf32> to vector<8x8xf32>
    %7 = vector.extract_strided_slice %2 {offsets = [0, 0], sizes = [8, 1], strides = [1, 1]} : vector<8x10xf32> to vector<8x1xf32>
    %8 = vector.extract_strided_slice %2 {offsets = [0, 1], sizes = [8, 1], strides = [1, 1]} : vector<8x10xf32> to vector<8x1xf32>
    %9 = vector.extract_strided_slice %2 {offsets = [0, 2], sizes = [8, 1], strides = [1, 1]} : vector<8x10xf32> to vector<8x1xf32>
    %10 = vector.extract_strided_slice %2 {offsets = [0, 3], sizes = [8, 1], strides = [1, 1]} : vector<8x10xf32> to vector<8x1xf32>
    %11 = vector.extract_strided_slice %2 {offsets = [0, 4], sizes = [8, 1], strides = [1, 1]} : vector<8x10xf32> to vector<8x1xf32>
    %12 = vector.extract_strided_slice %2 {offsets = [0, 5], sizes = [8, 1], strides = [1, 1]} : vector<8x10xf32> to vector<8x1xf32>
    %13 = vector.extract_strided_slice %2 {offsets = [0, 6], sizes = [8, 1], strides = [1, 1]} : vector<8x10xf32> to vector<8x1xf32>
    %14 = vector.extract_strided_slice %2 {offsets = [0, 7], sizes = [8, 1], strides = [1, 1]} : vector<8x10xf32> to vector<8x1xf32>
    %15 = vector.extract_strided_slice %2 {offsets = [0, 8], sizes = [8, 1], strides = [1, 1]} : vector<8x10xf32> to vector<8x1xf32>
    %16 = vector.extract_strided_slice %2 {offsets = [0, 9], sizes = [8, 1], strides = [1, 1]} : vector<8x10xf32> to vector<8x1xf32>
    %17 = vector.extract_strided_slice %3 {offsets = [0, 0], sizes = [8, 1], strides = [1, 1]} : vector<8x2xf32> to vector<8x1xf32>
    %18 = vector.extract_strided_slice %0 {offsets = [0, 0], sizes = [1, 256], strides = [1, 1]} : vector<2x256xf32> to vector<1x256xf32>
    %19 = vector.broadcast %17 : vector<8x1xf32> to vector<8x256xf32>
    %20 = vector.broadcast %18 : vector<1x256xf32> to vector<8x256xf32>
    %21 = arith.mulf %19, %20 : vector<8x256xf32>
    %22 = vector.extract_strided_slice %3 {offsets = [0, 1], sizes = [8, 1], strides = [1, 1]} : vector<8x2xf32> to vector<8x1xf32>
    %23 = vector.extract_strided_slice %0 {offsets = [1, 0], sizes = [1, 256], strides = [1, 1]} : vector<2x256xf32> to vector<1x256xf32>
    %24 = vector.broadcast %22 : vector<8x1xf32> to vector<8x256xf32>
    %25 = vector.broadcast %23 : vector<1x256xf32> to vector<8x256xf32>
    %26 = arith.mulf %24, %25 : vector<8x256xf32>
    %27 = arith.addf %21, %26 : vector<8x256xf32>
    %28 = vector.broadcast %7 : vector<8x1xf32> to vector<8x256xf32>
    %29 = arith.addf %27, %28 : vector<8x256xf32>
    %cst = arith.constant dense<0.000000e+00> : vector<256xf32>
    %30 = vector.multi_reduction <add>, %29, %cst [0] : vector<8x256xf32> to vector<256xf32>
    %31 = vector.shape_cast %30 : vector<256xf32> to vector<1x256xf32>
    %cst_5 = arith.constant 8.000000e+00 : f32
    %32 = vector.broadcast %cst_5 : f32 to vector<1x256xf32>
    %33 = arith.divf %31, %32 : vector<1x256xf32>
    %34 = vector.broadcast %33 : vector<1x256xf32> to vector<8x256xf32>
    %35 = arith.subf %29, %34 : vector<8x256xf32>
    %36 = arith.mulf %35, %35 : vector<8x256xf32>
    %cst_6 = arith.constant dense<0.000000e+00> : vector<256xf32>
    %37 = vector.multi_reduction <add>, %36, %cst_6 [0] : vector<8x256xf32> to vector<256xf32>
    %38 = vector.shape_cast %37 : vector<256xf32> to vector<1x256xf32>
    %cst_7 = arith.constant 8.000000e+00 : f32
    %39 = vector.broadcast %cst_7 : f32 to vector<1x256xf32>
    %40 = arith.divf %38, %39 : vector<1x256xf32>
    %41 = vector.broadcast %33 : vector<1x256xf32> to vector<8x256xf32>
    %42 = arith.subf %29, %41 : vector<8x256xf32>
    %cst_8 = arith.constant 9.99999974E-6 : f32
    %43 = vector.broadcast %cst_8 : f32 to vector<1x256xf32>
    %44 = arith.addf %40, %43 : vector<1x256xf32>
    %45 = math.rsqrt %44 : vector<1x256xf32>
    %46 = vector.broadcast %45 : vector<1x256xf32> to vector<8x256xf32>
    %47 = arith.mulf %42, %46 : vector<8x256xf32>
    %48 = vector.broadcast %8 : vector<8x1xf32> to vector<8x256xf32>
    %49 = arith.mulf %47, %48 : vector<8x256xf32>
    %50 = vector.broadcast %9 : vector<8x1xf32> to vector<8x256xf32>
    %51 = arith.addf %49, %50 : vector<8x256xf32>
    %cst_9 = arith.constant 0.000000e+00 : f32
    %52 = vector.broadcast %cst_9 : f32 to vector<8x256xf32>
    %53 = arith.maximumf %51, %52 : vector<8x256xf32>
    %cst_10 = arith.constant dense<0.000000e+00> : vector<8x256xf32>
    %54 = tpu.matmul %4, %53, %cst_10 {dimension_numbers = #tpu.dot_dimension_numbers<[1], [0], [0], [1], [0, 0, 1, 1], [], []>} : vector<8x8xf32>, vector<8x256xf32>, vector<8x256xf32> -> vector<8x256xf32>
    %55 = vector.broadcast %10 : vector<8x1xf32> to vector<8x256xf32>
    %56 = arith.addf %54, %55 : vector<8x256xf32>
    %cst_11 = arith.constant dense<0.000000e+00> : vector<256xf32>
    %57 = vector.multi_reduction <add>, %56, %cst_11 [0] : vector<8x256xf32> to vector<256xf32>
    %58 = vector.shape_cast %57 : vector<256xf32> to vector<1x256xf32>
    %cst_12 = arith.constant 8.000000e+00 : f32
    %59 = vector.broadcast %cst_12 : f32 to vector<1x256xf32>
    %60 = arith.divf %58, %59 : vector<1x256xf32>
    %61 = vector.broadcast %60 : vector<1x256xf32> to vector<8x256xf32>
    %62 = arith.subf %56, %61 : vector<8x256xf32>
    %63 = arith.mulf %62, %62 : vector<8x256xf32>
    %cst_13 = arith.constant dense<0.000000e+00> : vector<256xf32>
    %64 = vector.multi_reduction <add>, %63, %cst_13 [0] : vector<8x256xf32> to vector<256xf32>
    %65 = vector.shape_cast %64 : vector<256xf32> to vector<1x256xf32>
    %cst_14 = arith.constant 8.000000e+00 : f32
    %66 = vector.broadcast %cst_14 : f32 to vector<1x256xf32>
    %67 = arith.divf %65, %66 : vector<1x256xf32>
    %68 = vector.broadcast %60 : vector<1x256xf32> to vector<8x256xf32>
    %69 = arith.subf %56, %68 : vector<8x256xf32>
    %cst_15 = arith.constant 9.99999974E-6 : f32
    %70 = vector.broadcast %cst_15 : f32 to vector<1x256xf32>
    %71 = arith.addf %67, %70 : vector<1x256xf32>
    %72 = math.rsqrt %71 : vector<1x256xf32>
    %73 = vector.broadcast %72 : vector<1x256xf32> to vector<8x256xf32>
    %74 = arith.mulf %69, %73 : vector<8x256xf32>
    %75 = vector.broadcast %11 : vector<8x1xf32> to vector<8x256xf32>
    %76 = arith.mulf %74, %75 : vector<8x256xf32>
    %77 = vector.broadcast %12 : vector<8x1xf32> to vector<8x256xf32>
    %78 = arith.addf %76, %77 : vector<8x256xf32>
    %cst_16 = arith.constant 0.000000e+00 : f32
    %79 = vector.broadcast %cst_16 : f32 to vector<8x256xf32>
    %80 = arith.maximumf %78, %79 : vector<8x256xf32>
    %cst_17 = arith.constant dense<0.000000e+00> : vector<8x256xf32>
    %81 = tpu.matmul %5, %80, %cst_17 {dimension_numbers = #tpu.dot_dimension_numbers<[1], [0], [0], [1], [0, 0, 1, 1], [], []>} : vector<8x8xf32>, vector<8x256xf32>, vector<8x256xf32> -> vector<8x256xf32>
    %82 = vector.broadcast %13 : vector<8x1xf32> to vector<8x256xf32>
    %83 = arith.addf %81, %82 : vector<8x256xf32>
    %cst_18 = arith.constant dense<0.000000e+00> : vector<256xf32>
    %84 = vector.multi_reduction <add>, %83, %cst_18 [0] : vector<8x256xf32> to vector<256xf32>
    %85 = vector.shape_cast %84 : vector<256xf32> to vector<1x256xf32>
    %cst_19 = arith.constant 8.000000e+00 : f32
    %86 = vector.broadcast %cst_19 : f32 to vector<1x256xf32>
    %87 = arith.divf %85, %86 : vector<1x256xf32>
    %88 = vector.broadcast %87 : vector<1x256xf32> to vector<8x256xf32>
    %89 = arith.subf %83, %88 : vector<8x256xf32>
    %90 = arith.mulf %89, %89 : vector<8x256xf32>
    %cst_20 = arith.constant dense<0.000000e+00> : vector<256xf32>
    %91 = vector.multi_reduction <add>, %90, %cst_20 [0] : vector<8x256xf32> to vector<256xf32>
    %92 = vector.shape_cast %91 : vector<256xf32> to vector<1x256xf32>
    %cst_21 = arith.constant 8.000000e+00 : f32
    %93 = vector.broadcast %cst_21 : f32 to vector<1x256xf32>
    %94 = arith.divf %92, %93 : vector<1x256xf32>
    %95 = vector.broadcast %87 : vector<1x256xf32> to vector<8x256xf32>
    %96 = arith.subf %83, %95 : vector<8x256xf32>
    %cst_22 = arith.constant 9.99999974E-6 : f32
    %97 = vector.broadcast %cst_22 : f32 to vector<1x256xf32>
    %98 = arith.addf %94, %97 : vector<1x256xf32>
    %99 = math.rsqrt %98 : vector<1x256xf32>
    %100 = vector.broadcast %99 : vector<1x256xf32> to vector<8x256xf32>
    %101 = arith.mulf %96, %100 : vector<8x256xf32>
    %102 = vector.broadcast %14 : vector<8x1xf32> to vector<8x256xf32>
    %103 = arith.mulf %101, %102 : vector<8x256xf32>
    %104 = vector.broadcast %15 : vector<8x1xf32> to vector<8x256xf32>
    %105 = arith.addf %103, %104 : vector<8x256xf32>
    %cst_23 = arith.constant 0.000000e+00 : f32
    %106 = vector.broadcast %cst_23 : f32 to vector<8x256xf32>
    %107 = arith.maximumf %105, %106 : vector<8x256xf32>
    %cst_24 = arith.constant dense<0.000000e+00> : vector<8x256xf32>
    %108 = tpu.matmul %6, %107, %cst_24 {dimension_numbers = #tpu.dot_dimension_numbers<[1], [0], [0], [1], [0, 0, 1, 1], [], []>} : vector<8x8xf32>, vector<8x256xf32>, vector<8x256xf32> -> vector<8x256xf32>
    %109 = vector.broadcast %16 : vector<8x1xf32> to vector<8x256xf32>
    %110 = arith.addf %108, %109 : vector<8x256xf32>
    %c0_25 = arith.constant 0 : index
    %c0_26 = arith.constant 0 : index
    %111 = vector.load %arg4[%c0_25, %c0_26] : memref<8x256xf32, #tpu.memory_space<vmem>>, vector<8x256xf32>
    tpu.vector_store %arg4[%c0_25, %c0_26], %110 {strides = array<i32>} : memref<8x256xf32, #tpu.memory_space<vmem>>, vector<8x256xf32>,
    return
  }
  func.func @transform_0(%arg0: i32) -> (i32, i32) {
    %c0_i32 = arith.constant 0 : i32
    %c0_i32_0 = arith.constant 0 : i32
    return %c0_i32, %arg0 : i32, i32
  }
  func.func @transform_1(%arg0: i32) -> (i32, i32) {
    %c0_i32 = arith.constant 0 : i32
    %c0_i32_0 = arith.constant 0 : i32
    %c0_i32_1 = arith.constant 0 : i32
    return %c0_i32, %c0_i32_0 : i32, i32
  }
  func.func @transform_2(%arg0: i32) -> (i32, i32) {
    %c0_i32 = arith.constant 0 : i32
    %c0_i32_0 = arith.constant 0 : i32
    %c0_i32_1 = arith.constant 0 : i32
    return %c0_i32, %c0_i32_0 : i32, i32
  }
  func.func @transform_3(%arg0: i32) -> (i32, i32) {
    %c0_i32 = arith.constant 0 : i32
    %c0_i32_0 = arith.constant 0 : i32
    return %c0_i32, %arg0 : i32, i32
  }
}

</mosaic_0001>

<llo_original>
// kernel: _dynamic_pos_bias_call.1
$region0: #{_dynamic_pos_bias_call.1}
  #allocation0 [shape = 'u32[]', space=smem, size = 0x4, offset = 0x4, fixed_abs, tag = 'smem constant byte address 0x4 - core index']
  #allocation1 [shape = 'u32[72,128]{1,0:T(1,128)}', space=vmem, size = 0x9000, scoped, tag = 'internal scratch']
  %s0 = inlined_call_operand.vmem [shape: f32[2,256], index: 0, kind: input, shape index: {}]
  %s1 = inlined_call_operand.hbm [shape: f32[32,8], index: 1, kind: input, shape index: {}]
  %s2 = inlined_call_operand.vmem [shape: f32[8,10], index: 2, kind: input, shape index: {}]
  %s3 = inlined_call_operand.vmem [shape: f32[8,256], index: 3, kind: output, shape index: {}]
  %s4 = sld [smem:[#allocation0]]
  $region26: #{_dynamic_pos_bias_call.1} parent=0
    _
  %s6 = ssub.s32 1, %s4
  %s7 = scalar_select 0, %s6, %s4
  $region1: #{_dynamic_pos_bias_call.1} parent=0
    #allocation2 [shape = 'u8[16384]{0}', space=vmem, size = 0x4000, scoped, tag = 'input window, operand 1, single buffered']
    #allocation3 [shape = 's32[1]{0}', space=sflag, size = 0x4, scoped, tag = 'scoped memory for _dynamic_pos_bias_call.1']
    %8 = vsyncpa [#allocation3], 0
    // Predicated region
    $region2: #{_dynamic_pos_bias_call.1} parent=1 // pred_check
      _
    $region3: #{_dynamic_pos_bias_call.1} parent=1 // pred_check_branch
      %10 = sbr.rel (0) target = $region5
    $region4: #{_dynamic_pos_bias_call.1} parent=1 // pred_region
      _
    $region5: #{_dynamic_pos_bias_call.1} parent=1 // pred_fallthru
      _
    // Predicated region
    $region6: #{_dynamic_pos_bias_call.1} parent=1 // pred_check
      _
    $region7: #{_dynamic_pos_bias_call.1} parent=1 // pred_check_branch
      %12 = sbr.rel (0) target = $region9
    $region8: #{_dynamic_pos_bias_call.1} parent=1 // pred_region
      %14 = vsyncadd [#allocation3], 0
      %s15 = sshll.u32 %s1, 4
      %s16 = int_to_ptr.hbm [resolvable:$true] %s15
      %s17 = sshll.u32 [#allocation2], 4
      %s18 = int_to_ptr.vmem [resolvable:$true] %s17
      %23 = dma.hbm_to_vmem [thread:$0]  %s16, 512, %s18, [#allocation3], 128, 128, 8
    $region9: #{_dynamic_pos_bias_call.1} parent=1 // pred_fallthru
      _
    // Predicated region
    $region10: #{_dynamic_pos_bias_call.1} parent=1 // pred_check
      _
    $region11: #{_dynamic_pos_bias_call.1} parent=1 // pred_check_branch
      %25 = sbr.rel (0) target = $region13
    $region12: #{_dynamic_pos_bias_call.1} parent=1 // pred_region
      _
    $region13: #{_dynamic_pos_bias_call.1} parent=1 // pred_fallthru
      _
    // Predicated region
    $region14: #{_dynamic_pos_bias_call.1} parent=1 // pred_check
      _
    $region15: #{_dynamic_pos_bias_call.1} parent=1 // pred_check_branch
      %27 = sbr.rel (0) target = $region17
    $region16: #{_dynamic_pos_bias_call.1} parent=1 // pred_region
      %29 = dma.done [#allocation3], 512
    $region17: #{_dynamic_pos_bias_call.1} parent=1 // pred_fallthru
      _
    %v30 = vld [vmem:[%s0] sm:$0xf]
    %v31 = vld [vmem:[#allocation2] sm:$0xff]
    %v32 = vld [vmem:[#allocation2 + $0x8] sm:$0xff]
    %v33 = vld [vmem:[#allocation2 + $0x10] sm:$0xff]
    %v34 = vld [vmem:[#allocation2 + $0x18] sm:$0xff]
    %v35 = vld [vmem:[%s2] sm:$0xff]
    %37 = vset.pattern.permute.xlu0 0
    %38 = vperm.xlu0 %37, %v31
    %v39 = vpop.permute.xlu0 %38
    %v42 = vperm.slane %v30, 0
    %v43 = vperm.slane %v30, 2
    %v46 = vperm.slane %v42, 0
    %v47 = vperm.slane %v43, 0
    %v48 = vmul.f32 %v39, %v46
    %v49 = vmul.f32 %v39, %v47
    %50 = vset.pattern.permute.xlu0 1
    %51 = vperm.xlu0 %50, %v31
    %v52 = vpop.permute.xlu0 %51
    %v54 = vperm.slane %v30, 1
    %v55 = vperm.slane %v30, 3
    %v58 = vperm.slane %v54, 1
    %v59 = vperm.slane %v55, 1
    %v60 = vmul.f32 %v52, %v58
    %v61 = vmul.f32 %v52, %v59
    %v62 = vadd.f32 %v48, %v60
    %v63 = vadd.f32 %v49, %v61
    %65 = vset.pattern.permute.xlu0 0
    %66 = vperm.xlu0 %65, %v35
    %v67 = vpop.permute.xlu0 %66
    %v69 = vadd.f32 %v62, %v67
    %v70 = vadd.f32 %v63, %v67
    %v71 = vrot.slane %v69, 4
    %v72 = vadd.f32 %v69, %v71
    %v73 = vrot.slane %v72, 2
    %v74 = vadd.f32 %v72, %v73
    %v75 = vrot.slane %v74, 1
    %v76 = vadd.f32 %v74, %v75
    %v77 = vrot.slane %v70, 4
    %v78 = vadd.f32 %v70, %v77
    %v79 = vrot.slane %v78, 2
    %v80 = vadd.f32 %v78, %v79
    %v81 = vrot.slane %v80, 1
    %v82 = vadd.f32 %v80, %v81
    %v83 = vrcp.pop 8.0
    %v84 = vmul.f32 8.0, %v83
    %v85 = vsub.f32 1.0, %v84
    %v86 = vmul.f32 %v83, %v85
    %v87 = vadd.f32 %v83, %v86
    %vm88 = vweird.f32 %v83
    %v89 = vsel %vm88, %v83, %v87
    %v90 = vmul.f32 %v76, %v89
    %v91 = vmul.f32 %v82, %v89
    %v92 = vsub.f32 %v69, %v90
    %v93 = vsub.f32 %v70, %v91
    %v94 = vmul.f32 %v92, %v92
    %v95 = vmul.f32 %v93, %v93
    %v96 = vrot.slane %v94, 4
    %v97 = vadd.f32 %v94, %v96
    %v98 = vrot.slane %v97, 2
    %v99 = vadd.f32 %v97, %v98
    %v100 = vrot.slane %v99, 1
    %v101 = vadd.f32 %v99, %v100
    %v102 = vrot.slane %v95, 4
    %v103 = vadd.f32 %v95, %v102
    %v104 = vrot.slane %v103, 2
    %v105 = vadd.f32 %v103, %v104
    %v106 = vrot.slane %v105, 1
    %v107 = vadd.f32 %v105, %v106
    %v108 = vmul.f32 %v101, %v89
    %v109 = vmul.f32 %v107, %v89
    %v110 = vadd.f32 %v108, 1e-05
    %v111 = vadd.f32 %v109, 1e-05
    %v112 = vrsqrt.pop %v110
    %v113 = vmul.f32 %v112, %v110
    %v114 = vmul.f32 %v113, %v112
    %v115 = vmul.f32 0.5, %v114
    %v116 = vsub.f32 1.5, %v115
    %v117 = vmul.f32 %v112, %v116
    %vm118 = vweird.f32 %v110
    %vm119 = vweird.f32 %v112
    %vm120 = vmor %vm118, %vm119
    %v121 = vsel %vm120, %v112, %v117
    %v122 = vrsqrt.pop %v111
    %v123 = vmul.f32 %v122, %v111
    %v124 = vmul.f32 %v123, %v122
    %v125 = vmul.f32 0.5, %v124
    %v126 = vsub.f32 1.5, %v125
    %v127 = vmul.f32 %v122, %v126
    %vm128 = vweird.f32 %v111
    %vm129 = vweird.f32 %v122
    %vm130 = vmor %vm128, %vm129
    %v131 = vsel %vm130, %v122, %v127
    %v132 = vmul.f32 %v92, %v121
    %v133 = vmul.f32 %v93, %v131
    %134 = vset.pattern.permute.xlu0 1
    %135 = vperm.xlu0 %134, %v35
    %v136 = vpop.permute.xlu0 %135
    %v138 = vmul.f32 %v132, %v136
    %v139 = vmul.f32 %v133, %v136
    %140 = vset.pattern.permute.xlu0 2
    %141 = vperm.xlu0 %140, %v35
    %v142 = vpop.permute.xlu0 %141
    %v144 = vadd.f32 %v138, %v142
    %v145 = vadd.f32 %v139, %v142
    %v146 = vmax.f32 %v144, 0.0
    %v147 = vmax.f32 %v145, 0.0
    %148 = vset.pattern.permute.xlu0 3
    %149 = vperm.xlu0 %148, %v35
    %v150 = vpop.permute.xlu0 %149
    %vm152 = vcmask 64512
    %v154 = vsel %vm152, %v32, 0
    %156 = vmatpush.msra.mxu0 0.0
    %157 = vmatpush.msra.mxu0 0.0
    %158 = vmatpush.msra.mxu0 0.0
    %159 = vmatpush.msra.mxu0 0.0
    %160 = vmatpush.msra.mxu0 0.0
    %161 = vmatpush.msra.mxu0 0.0
    %162 = vmatpush.msra.mxu0 0.0
    %163 = vmatpush.msra.mxu0 0.0
    %164 = vmatpush.msra.mxu0 0.0
    %165 = vmatpush.msra.mxu0 0.0
    %166 = vmatpush.msra.mxu0 0.0
    %167 = vmatpush.msra.mxu0 0.0
    %168 = vmatpush.msra.mxu0 0.0
    %169 = vmatpush.msra.mxu0 0.0
    %170 = vmatpush.msra.mxu0 0.0
    %171 = vmatpush.msra.mxu0 %v146
    %172 = vmatmul.f32.gmra.mxu0 %v154
    %v173 = vpop.f32.mrf.mxu0
    %v174 = vadd.f32 %v150, %v173
    %175 = vdwg.mxu0
    %176 = vmatpush.msra.mxu0 0.0
    %177 = vmatpush.msra.mxu0 0.0
    %178 = vmatpush.msra.mxu0 0.0
    %179 = vmatpush.msra.mxu0 0.0
    %180 = vmatpush.msra.mxu0 0.0
    %181 = vmatpush.msra.mxu0 0.0
    %182 = vmatpush.msra.mxu0 0.0
    %183 = vmatpush.msra.mxu0 0.0
    %184 = vmatpush.msra.mxu0 0.0
    %185 = vmatpush.msra.mxu0 0.0
    %186 = vmatpush.msra.mxu0 0.0
    %187 = vmatpush.msra.mxu0 0.0
    %188 = vmatpush.msra.mxu0 0.0
    %189 = vmatpush.msra.mxu0 0.0
    %190 = vmatpush.msra.mxu0 0.0
    %191 = vmatpush.msra.mxu0 %v147
    %192 = vmatmul.f32.gmra.mxu0 %v154
    %v193 = vpop.f32.mrf.mxu0
    %v194 = vadd.f32 %v150, %v193
    %195 = vdwg.mxu0
    %v196 = vrot.slane %v174, 4
    %v197 = vadd.f32 %v174, %v196
    %v198 = vrot.slane %v197, 2
    %v199 = vadd.f32 %v197, %v198
    %v200 = vrot.slane %v199, 1
    %v201 = vadd.f32 %v199, %v200
    %v202 = vrot.slane %v194, 4
    %v203 = vadd.f32 %v194, %v202
    %v204 = vrot.slane %v203, 2
    %v205 = vadd.f32 %v203, %v204
    %v206 = vrot.slane %v205, 1
    %v207 = vadd.f32 %v205, %v206
    %v208 = vmul.f32 %v201, %v89
    %v209 = vmul.f32 %v207, %v89
    %v210 = vsub.f32 %v174, %v208
    %v211 = vsub.f32 %v194, %v209
    %v212 = vmul.f32 %v210, %v210
    %v213 = vmul.f32 %v211, %v211
    %v214 = vrot.slane %v212, 4
    %v215 = vadd.f32 %v212, %v214
    %v216 = vrot.slane %v215, 2
    %v217 = vadd.f32 %v215, %v216
    %v218 = vrot.slane %v217, 1
    %v219 = vadd.f32 %v217, %v218
    %v220 = vrot.slane %v213, 4
    %v221 = vadd.f32 %v213, %v220
    %v222 = vrot.slane %v221, 2
    %v223 = vadd.f32 %v221, %v222
    %v224 = vrot.slane %v223, 1
    %v225 = vadd.f32 %v223, %v224
    %v226 = vmul.f32 %v219, %v89
    %v227 = vmul.f32 %v225, %v89
    %v228 = vadd.f32 %v226, 1e-05
    %v229 = vadd.f32 %v227, 1e-05
    %v230 = vrsqrt.pop %v228
    %v231 = vmul.f32 %v230, %v228
    %v232 = vmul.f32 %v231, %v230
    %v233 = vmul.f32 0.5, %v232
    %v234 = vsub.f32 1.5, %v233
    %v235 = vmul.f32 %v230, %v234
    %vm236 = vweird.f32 %v228
    %vm237 = vweird.f32 %v230
    %vm238 = vmor %vm236, %vm237
    %v239 = vsel %vm238, %v230, %v235
    %v240 = vrsqrt.pop %v229
    %v241 = vmul.f32 %v240, %v229
    %v242 = vmul.f32 %v241, %v240
    %v243 = vmul.f32 0.5, %v242
    %v244 = vsub.f32 1.5, %v243
    %v245 = vmul.f32 %v240, %v244
    %vm246 = vweird.f32 %v229
    %vm247 = vweird.f32 %v240
    %vm248 = vmor %vm246, %vm247
    %v249 = vsel %vm248, %v240, %v245
    %v250 = vmul.f32 %v210, %v239
    %v251 = vmul.f32 %v211, %v249
    %252 = vset.pattern.permute.xlu0 4
    %253 = vperm.xlu0 %252, %v35
    %v254 = vpop.permute.xlu0 %253
    %v256 = vmul.f32 %v250, %v254
    %v257 = vmul.f32 %v251, %v254
    %258 = vset.pattern.permute.xlu0 5
    %259 = vperm.xlu0 %258, %v35
    %v260 = vpop.permute.xlu0 %259
    %v262 = vadd.f32 %v256, %v260
    %v263 = vadd.f32 %v257, %v260
    %v264 = vmax.f32 %v262, 0.0
    %v265 = vmax.f32 %v263, 0.0
    %266 = vset.pattern.permute.xlu0 6
    %267 = vperm.xlu0 %266, %v35
    %v268 = vpop.permute.xlu0 %267
    %v271 = vsel %vm152, %v33, 0
    %273 = vmatpush.msra.mxu0 0.0
    %274 = vmatpush.msra.mxu0 0.0
    %275 = vmatpush.msra.mxu0 0.0
    %276 = vmatpush.msra.mxu0 0.0
    %277 = vmatpush.msra.mxu0 0.0
    %278 = vmatpush.msra.mxu0 0.0
    %279 = vmatpush.msra.mxu0 0.0
    %280 = vmatpush.msra.mxu0 0.0
    %281 = vmatpush.msra.mxu0 0.0
    %282 = vmatpush.msra.mxu0 0.0
    %283 = vmatpush.msra.mxu0 0.0
    %284 = vmatpush.msra.mxu0 0.0
    %285 = vmatpush.msra.mxu0 0.0
    %286 = vmatpush.msra.mxu0 0.0
    %287 = vmatpush.msra.mxu0 0.0
    %288 = vmatpush.msra.mxu0 %v264
    %289 = vmatmul.f32.gmra.mxu0 %v271
    %v290 = vpop.f32.mrf.mxu0
    %v291 = vadd.f32 %v268, %v290
    %292 = vdwg.mxu0
    %293 = vmatpush.msra.mxu0 0.0
    %294 = vmatpush.msra.mxu0 0.0
    %295 = vmatpush.msra.mxu0 0.0
    %296 = vmatpush.msra.mxu0 0.0
    %297 = vmatpush.msra.mxu0 0.0
    %298 = vmatpush.msra.mxu0 0.0
    %299 = vmatpush.msra.mxu0 0.0
    %300 = vmatpush.msra.mxu0 0.0
    %301 = vmatpush.msra.mxu0 0.0
    %302 = vmatpush.msra.mxu0 0.0
    %303 = vmatpush.msra.mxu0 0.0
    %304 = vmatpush.msra.mxu0 0.0
    %305 = vmatpush.msra.mxu0 0.0
    %306 = vmatpush.msra.mxu0 0.0
    %307 = vmatpush.msra.mxu0 0.0
    %308 = vmatpush.msra.mxu0 %v265
    %309 = vmatmul.f32.gmra.mxu0 %v271
    %v310 = vpop.f32.mrf.mxu0
    %v311 = vadd.f32 %v268, %v310
    %312 = vdwg.mxu0
    %v313 = vrot.slane %v291, 4
    %v314 = vadd.f32 %v291, %v313
    %v315 = vrot.slane %v314, 2
    %v316 = vadd.f32 %v314, %v315
    %v317 = vrot.slane %v316, 1
    %v318 = vadd.f32 %v316, %v317
    %v319 = vrot.slane %v311, 4
    %v320 = vadd.f32 %v311, %v319
    %v321 = vrot.slane %v320, 2
    %v322 = vadd.f32 %v320, %v321
    %v323 = vrot.slane %v322, 1
    %v324 = vadd.f32 %v322, %v323
    %v325 = vmul.f32 %v318, %v89
    %v326 = vmul.f32 %v324, %v89
    %v327 = vsub.f32 %v291, %v325
    %v328 = vsub.f32 %v311, %v326
    %v329 = vmul.f32 %v327, %v327
    %v330 = vmul.f32 %v328, %v328
    %v331 = vrot.slane %v329, 4
    %v332 = vadd.f32 %v329, %v331
    %v333 = vrot.slane %v332, 2
    %v334 = vadd.f32 %v332, %v333
    %v335 = vrot.slane %v334, 1
    %v336 = vadd.f32 %v334, %v335
    %v337 = vrot.slane %v330, 4
    %v338 = vadd.f32 %v330, %v337
    %v339 = vrot.slane %v338, 2
    %v340 = vadd.f32 %v338, %v339
    %v341 = vrot.slane %v340, 1
    %v342 = vadd.f32 %v340, %v341
    %v343 = vmul.f32 %v336, %v89
    %v344 = vmul.f32 %v342, %v89
    %v345 = vadd.f32 %v343, 1e-05
    %v346 = vadd.f32 %v344, 1e-05
    %v347 = vrsqrt.pop %v345
    %v348 = vmul.f32 %v347, %v345
    %v349 = vmul.f32 %v348, %v347
    %v350 = vmul.f32 0.5, %v349
    %v351 = vsub.f32 1.5, %v350
    %v352 = vmul.f32 %v347, %v351
    %vm353 = vweird.f32 %v345
    %vm354 = vweird.f32 %v347
    %vm355 = vmor %vm353, %vm354
    %v356 = vsel %vm355, %v347, %v352
    %v357 = vrsqrt.pop %v346
    %v358 = vmul.f32 %v357, %v346
    %v359 = vmul.f32 %v358, %v357
    %v360 = vmul.f32 0.5, %v359
    %v361 = vsub.f32 1.5, %v360
    %v362 = vmul.f32 %v357, %v361
    %vm363 = vweird.f32 %v346
    %vm364 = vweird.f32 %v357
    %vm365 = vmor %vm363, %vm364
    %v366 = vsel %vm365, %v357, %v362
    %v367 = vmul.f32 %v327, %v356
    %v368 = vmul.f32 %v328, %v366
    %369 = vset.pattern.permute.xlu0 7
    %370 = vperm.xlu0 %369, %v35
    %v371 = vpop.permute.xlu0 %370
    %v373 = vmul.f32 %v367, %v371
    %v374 = vmul.f32 %v368, %v371
    %375 = vset.pattern.permute.xlu0 8
    %376 = vperm.xlu0 %375, %v35
    %v377 = vpop.permute.xlu0 %376
    %v379 = vadd.f32 %v373, %v377
    %v380 = vadd.f32 %v374, %v377
    %v381 = vmax.f32 %v379, 0.0
    %v382 = vmax.f32 %v380, 0.0
    %383 = vset.pattern.permute.xlu0 9
    %384 = vperm.xlu0 %383, %v35
    %v385 = vpop.permute.xlu0 %384
    %v388 = vsel %vm152, %v34, 0
    %390 = vmatpush.msra.mxu0 0.0
    %391 = vmatpush.msra.mxu0 0.0
    %392 = vmatpush.msra.mxu0 0.0
    %393 = vmatpush.msra.mxu0 0.0
    %394 = vmatpush.msra.mxu0 0.0
    %395 = vmatpush.msra.mxu0 0.0
    %396 = vmatpush.msra.mxu0 0.0
    %397 = vmatpush.msra.mxu0 0.0
    %398 = vmatpush.msra.mxu0 0.0
    %399 = vmatpush.msra.mxu0 0.0
    %400 = vmatpush.msra.mxu0 0.0
    %401 = vmatpush.msra.mxu0 0.0
    %402 = vmatpush.msra.mxu0 0.0
    %403 = vmatpush.msra.mxu0 0.0
    %404 = vmatpush.msra.mxu0 0.0
    %405 = vmatpush.msra.mxu0 %v381
    %406 = vmatmul.f32.gmra.mxu0 %v388
    %v407 = vpop.f32.mrf.mxu0
    %v408 = vadd.f32 %v385, %v407
    %409 = vdwg.mxu0
    %410 = vmatpush.msra.mxu0 0.0
    %411 = vmatpush.msra.mxu0 0.0
    %412 = vmatpush.msra.mxu0 0.0
    %413 = vmatpush.msra.mxu0 0.0
    %414 = vmatpush.msra.mxu0 0.0
    %415 = vmatpush.msra.mxu0 0.0
    %416 = vmatpush.msra.mxu0 0.0
    %417 = vmatpush.msra.mxu0 0.0
    %418 = vmatpush.msra.mxu0 0.0
    %419 = vmatpush.msra.mxu0 0.0
    %420 = vmatpush.msra.mxu0 0.0
    %421 = vmatpush.msra.mxu0 0.0
    %422 = vmatpush.msra.mxu0 0.0
    %423 = vmatpush.msra.mxu0 0.0
    %424 = vmatpush.msra.mxu0 0.0
    %425 = vmatpush.msra.mxu0 %v382
    %426 = vmatmul.f32.gmra.mxu0 %v388
    %v427 = vpop.f32.mrf.mxu0
    %v428 = vadd.f32 %v385, %v427
    %429 = vdwg.mxu0
    %430 = vst [vmem:[%s3] sm:$0xff] %v408
    %431 = vst [vmem:[%s3 + $0x8] sm:$0xff] %v428
    // Predicated region
    $region18: #{_dynamic_pos_bias_call.1} parent=1 // pred_check
      _
    $region19: #{_dynamic_pos_bias_call.1} parent=1 // pred_check_branch
      %433 = sbr.rel (0) target = $region21
    $region20: #{_dynamic_pos_bias_call.1} parent=1 // pred_region
      _
    $region21: #{_dynamic_pos_bias_call.1} parent=1 // pred_fallthru
      _
    // Predicated region
    $region22: #{_dynamic_pos_bias_call.1} parent=1 // pred_check
      _
    $region23: #{_dynamic_pos_bias_call.1} parent=1 // pred_check_branch
      %435 = sbr.rel (0) target = $region25
    $region24: #{_dynamic_pos_bias_call.1} parent=1 // pred_region
      _
    $region25: #{_dynamic_pos_bias_call.1} parent=1 // pred_fallthru
      _
    %436 = vsyncpa [#allocation3], 1

</llo_original>
